<compile_context>
chip_gen: v5e
topology: v5e:2x2
jax: 0.10.0
libtpu: 0.0.40
codegen_flags: <defaults>
</compile_context>

<pallas_src>
import jax
import jax.numpy as jnp
from jax.experimental import pallas as pl
from jax.experimental.pallas import tpu as pltpu

# SELU constants (match torch.nn.SELU)
_SELU_ALPHA = 1.6732632423543772
_SELU_SCALE = 1.0507009873554805

_LANE = 128      # last-dim multiple: dense DMAs, full MXU tiles, unmasked vst
_SUBLANE = 8     # second-to-last-dim multiple

# Conservative cross-generation budget for the resident blocks
# (v5e scoped default is 16 MiB; v7x physical VMEM is 64 MiB).
_VMEM_SOFT_BUDGET = 24 << 20
_VMEM_LIMIT_CAP = 48 << 20


def _selu(x):
    # The select discards the exp() on the positive branch -> no overflow leakage.
    return _SELU_SCALE * jnp.where(x > 0, x, _SELU_ALPHA * (jnp.exp(x) - 1.0))


def _round_up(n, m):
    return ((n + m - 1) // m) * m


# --------------------------------------------------------------------------
# Kernel: entire MLP fused — 3 MXU matmuls + 2 SELU (VPU select + EUP exp),
# f32 accumulation, bias adds kept in the epilogue of each matmul.
# --------------------------------------------------------------------------
def weaknet_kernel(x_ref, w1_ref, b1_ref, w2_ref, b2_ref, w3_ref, b3_ref, o_ref):
    x = x_ref[...]

    h1 = jnp.dot(x, w1_ref[...], preferred_element_type=jnp.float32) + b1_ref[...]
    h1 = _selu(h1)

    h2 = jnp.dot(h1.astype(w2_ref.dtype), w2_ref[...],
                 preferred_element_type=jnp.float32) + b2_ref[...]
    h2 = _selu(h2)

    y = jnp.dot(h2.astype(w3_ref.dtype), w3_ref[...],
                preferred_element_type=jnp.float32) + b3_ref[...]
    o_ref[...] = y.astype(o_ref.dtype)


# --------------------------------------------------------------------------
# Parameter init / one-time padding
# --------------------------------------------------------------------------
def _xavier_uniform(key, fan_in, fan_out, gain):
    # Matches torch.nn.init.xavier_uniform_(W, gain) for W of shape
    # (fan_out, fan_in), returned already transposed to (fan_in, fan_out).
    limit = gain * jnp.sqrt(6.0 / (fan_in + fan_out))
    return jax.random.uniform(
        key, (fan_in, fan_out), dtype=jnp.float32, minval=-limit, maxval=limit
    )


def init_weaknet_params(key, in_size, out_size):
    """Unpadded, pre-transposed (in, out) weights matching WeakNet's init."""
    hidden = 3 * (in_size + out_size)
    gain = 3.0 / 4.0
    k1, k2, k3 = jax.random.split(key, 3)
    return {
        "w1": _xavier_uniform(k1, in_size, hidden, gain),
        "b1": jnp.full((1, hidden), 0.01, dtype=jnp.float32),
        "w2": _xavier_uniform(k2, hidden, hidden, gain),
        "b2": jnp.full((1, hidden), 0.01, dtype=jnp.float32),
        "w3": _xavier_uniform(k3, hidden, out_size, gain),
        "b3": jnp.full((1, out_size), 0.01, dtype=jnp.float32),
    }


def prepare_weaknet_params(params, *, use_bf16=False, lane=_LANE):
    """One-time lane padding (+ optional bf16 cast) of the weights/biases.

    Done once at init so the per-forward XLA wrapper never re-reads/re-writes
    the weight tensors.  `lane` may be raised to 256 on v6e/v7x (256-wide MXU)
    for large production hidden sizes; 128 is optimal on v5e and for tiny dims.
    """
    w1, b1 = params["w1"], params["b1"]
    w2, b2 = params["w2"], params["b2"]
    w3, b3 = params["w3"], params["b3"]
    in_size, hidden = w1.shape
    out_size = w3.shape[1]

    in_p = _round_up(in_size, lane)
    hid_p = _round_up(hidden, lane)
    out_p = _round_up(out_size, lane)

    def pad2(a, rows, cols):
        return jnp.pad(a, ((0, rows - a.shape[0]), (0, cols - a.shape[1])))

    # Zero padding is exact: padded input cols are 0, padded hidden units see
    # SELU(0)=0 and have zero outgoing weights, padded output cols are 0.
    w_dtype = jnp.bfloat16 if use_bf16 else jnp.float32
    return {
        "w1": pad2(w1, in_p, hid_p).astype(w_dtype),
        "b1": pad2(b1, 1, hid_p).astype(jnp.float32),
        "w2": pad2(w2, hid_p, hid_p).astype(w_dtype),
        "b2": pad2(b2, 1, hid_p).astype(jnp.float32),
        "w3": pad2(w3, hid_p, out_p).astype(w_dtype),
        "b3": pad2(b3, 1, out_p).astype(jnp.float32),
        "meta": {
            "in_size": in_size, "hidden": hidden, "out_size": out_size,
            "in_p": in_p, "hid_p": hid_p, "out_p": out_p,
            "use_bf16": use_bf16,
        },
    }


# --------------------------------------------------------------------------
# Forward wrapper
# --------------------------------------------------------------------------
def weaknet_forward(x, prepared, *, bm_max=1024, min_grid_steps=2, unpad=True):
    """x: (B, in_size) f32.  prepared: output of prepare_weaknet_params()."""
    meta = prepared["meta"]
    in_size, out_size = meta["in_size"], meta["out_size"]
    in_p, hid_p, out_p = meta["in_p"], meta["hid_p"], meta["out_p"]
    assert x.shape[1] == in_size, (x.shape, in_size)

    B = x.shape[0]
    out_dtype = x.dtype
    w1, b1 = prepared["w1"], prepared["b1"]
    w2, b2 = prepared["w2"], prepared["b2"]
    w3, b3 = prepared["w3"], prepared["b3"]
    x_itemsize = 2 if meta["use_bf16"] else x.dtype.itemsize
    w_itemsize = w1.dtype.itemsize

    # --- batch tiling: pick the grid first, then the tile -------------------
    B_sub = _round_up(B, _SUBLANE)
    grid_n = pl.cdiv(B_sub, bm_max)
    if B_sub >= min_grid_steps * _SUBLANE:
        # >= 2 steps lets the "parallel" axis shard across v7x's 2 TensorCores.
        grid_n = max(grid_n, min_grid_steps)
    bm = _round_up(pl.cdiv(B_sub, grid_n), _SUBLANE)

    def vmem_estimate(bm_):
        weights = ((in_p * hid_p + hid_p * hid_p + hid_p * out_p) * w_itemsize
                   + (2 * hid_p + out_p) * 4)                      # single-buffered
        io = 2 * bm_ * (in_p * x_itemsize + out_p * out_dtype.itemsize)  # dbl-buf x/y
        interm = 2 * bm_ * hid_p * 4                               # live h1/h2 (f32)
        return weights + io + interm

    # Shrink the batch tile if the estimate blows the cross-generation budget.
    while bm > _SUBLANE and vmem_estimate(bm) > _VMEM_SOFT_BUDGET:
        bm = _round_up(bm // 2, _SUBLANE)
    grid_n = pl.cdiv(B_sub, bm)
    B_p = grid_n * bm
    # TODO(synk): if the weights alone exceed VMEM (very large hidden), add a
    # hidden-dim grid axis + VMEM accumulator instead of keeping w2 resident.

    est = vmem_estimate(bm)
    vmem_limit = None
    if est > (16 << 20):  # above v5e's scoped default
        vmem_limit = min(_round_up(int(est * 1.25), 1 << 20), _VMEM_LIMIT_CAP)

    # --- pad the activation only (weights were padded once at init) ---------
    x_p = jnp.pad(x, ((0, B_p - B), (0, in_p - in_size)))
    if meta["use_bf16"]:
        x_p = x_p.astype(jnp.bfloat16)

    flops = 2 * B_p * (in_p * hid_p + hid_p * hid_p + hid_p * out_p)
    bytes_accessed = (B_p * in_p * x_itemsize
                      + B_p * out_p * out_dtype.itemsize
                      + (in_p * hid_p + hid_p * hid_p + hid_p * out_p) * w_itemsize
                      + (2 * hid_p + out_p) * 4)
    cost = pl.CostEstimate(flops=flops,
                           transcendentals=2 * B_p * hid_p,
                           bytes_accessed=bytes_accessed)

    x_spec = pl.BlockSpec((bm, in_p), lambda i: (i, 0))
    # Lane-dense output block (out_p multiple of 128) -> unmasked vst.
    out_spec = pl.BlockSpec((bm, out_p), lambda i: (i, 0))

    def run(single_buffer_weights):
        if single_buffer_weights:
            # Grid-invariant blocks never refetch; one buffer halves their VMEM.
            def const_spec(shape):
                return pl.BlockSpec(shape, lambda i: (0, 0),
                                    pipeline_mode=pl.Buffered(1))
        else:
            def const_spec(shape):
                return pl.BlockSpec(shape, lambda i: (0, 0))

        in_specs = [
            x_spec,
            const_spec((in_p, hid_p)), const_spec((1, hid_p)),   # w1, b1
            const_spec((hid_p, hid_p)), const_spec((1, hid_p)),  # w2, b2
            const_spec((hid_p, out_p)), const_spec((1, out_p)),  # w3, b3
        ]
        return pl.pallas_call(
            weaknet_kernel,
            out_shape=jax.ShapeDtypeStruct((B_p, out_p), out_dtype),
            grid_spec=pltpu.PrefetchScalarGridSpec(
                num_scalar_prefetch=0,
                grid=(grid_n,),
                in_specs=in_specs,
                out_specs=out_spec,
            ),
            compiler_params=pltpu.CompilerParams(
                dimension_semantics=("parallel",),
                vmem_limit_bytes=vmem_limit,
            ),
            cost_estimate=cost,
        )(x_p, w1, b1, w2, b2, w3, b3)

    try:
        y_p = run(True)
    except Exception:  # jax build without Buffered(1)/pipeline_mode support
        y_p = run(False)

    if not unpad:
        return y_p  # (B_p, out_p): fused consumers can keep the padded layout
    return y_p[:B, :out_size]


def weaknet_reference(x, params):
    # Pure-JAX f32 reference of the same forward pass (unpadded params).
    h1 = _selu(x @ params["w1"] + params["b1"])
    h2 = _selu(h1 @ params["w2"] + params["b2"])
    return h2 @ params["w3"] + params["b3"]


if __name__ == "__main__":
    in_size, out_size = 16, 8          # hidden = 3 * (16 + 8) = 72
    batch = 16

    key = jax.random.PRNGKey(0)
    kx, kp = jax.random.split(key)
    x = jax.random.normal(kx, (batch, in_size), dtype=jnp.float32)
    params = init_weaknet_params(kp, in_size, out_size)
    prepared = prepare_weaknet_params(params)   # pad once, reuse for every forward

    y = jax.block_until_ready(weaknet_forward(x, prepared))
    y_ref = weaknet_reference(x, params)
    assert y.shape == (batch, out_size)
    assert jnp.allclose(y, y_ref, atol=1e-5, rtol=1e-5), "mismatch vs reference"

    # Tiled / non-divisible batch path (1030 -> two 520-row tiles, ~1% pad waste).
    xb = jax.random.normal(kx, (1030, in_size), dtype=jnp.float32)
    yb = jax.block_until_ready(weaknet_forward(xb, prepared))
    yb_ref = weaknet_reference(xb, params)
    assert yb.shape == (1030, out_size)
    assert jnp.allclose(yb, yb_ref, atol=1e-5, rtol=1e-5), "mismatch (tiled) vs reference"

    print("KERNEL_OK")
</pallas_src>

<mosaic_0001>
module attributes {stable_mosaic.version = 11 : i64} {
  func.func @weaknet_kernel(%arg0: i32, %arg1: memref<8x128xf32, #tpu.memory_space<vmem>>, %arg2: memref<128x128xf32, #tpu.memory_space<vmem>>, %arg3: memref<1x128xf32, #tpu.memory_space<vmem>>, %arg4: memref<128x128xf32, #tpu.memory_space<vmem>>, %arg5: memref<1x128xf32, #tpu.memory_space<vmem>>, %arg6: memref<128x128xf32, #tpu.memory_space<vmem>>, %arg7: memref<1x128xf32, #tpu.memory_space<vmem>>, %arg8: memref<8x128xf32, #tpu.memory_space<vmem>>) attributes {dimension_semantics = [#tpu.dimension_semantics<parallel>], iteration_bounds = array<i64: 2>, scalar_prefetch = 0 : i64, scratch_operands = 0 : i64, tpu.core_type = #tpu.core_type<tc>, window_params = [{transform_indices = @transform_0, window_bounds = array<i64: 8, 128>}, {pipeline_mode = #tpu.pipeline_mode<synchronous>, transform_indices = @transform_1, window_bounds = array<i64: 128, 128>}, {pipeline_mode = #tpu.pipeline_mode<synchronous>, transform_indices = @transform_2, window_bounds = array<i64: 1, 128>}, {pipeline_mode = #tpu.pipeline_mode<synchronous>, transform_indices = @transform_3, window_bounds = array<i64: 128, 128>}, {pipeline_mode = #tpu.pipeline_mode<synchronous>, transform_indices = @transform_4, window_bounds = array<i64: 1, 128>}, {pipeline_mode = #tpu.pipeline_mode<synchronous>, transform_indices = @transform_5, window_bounds = array<i64: 128, 128>}, {pipeline_mode = #tpu.pipeline_mode<synchronous>, transform_indices = @transform_6, window_bounds = array<i64: 1, 128>}, {transform_indices = @transform_7, window_bounds = array<i64: 8, 128>}]} {
    %c0 = arith.constant 0 : index
    %c0_0 = arith.constant 0 : index
    %0 = vector.load %arg1[%c0, %c0_0] : memref<8x128xf32, #tpu.memory_space<vmem>>, vector<8x128xf32>
    %c0_1 = arith.constant 0 : index
    %c0_2 = arith.constant 0 : index
    %1 = vector.load %arg2[%c0_1, %c0_2] : memref<128x128xf32, #tpu.memory_space<vmem>>, vector<128x128xf32>
    %cst = arith.constant dense<0.000000e+00> : vector<8x128xf32>
    %2 = tpu.matmul %0, %1, %cst {dimension_numbers = #tpu.dot_dimension_numbers<[1], [0], [0], [1], [0, 0, 1, 1], [], []>} : vector<8x128xf32>, vector<128x128xf32>, vector<8x128xf32> -> vector<8x128xf32>
    %c0_3 = arith.constant 0 : index
    %c0_4 = arith.constant 0 : index
    %3 = vector.load %arg3[%c0_3, %c0_4] : memref<1x128xf32, #tpu.memory_space<vmem>>, vector<1x128xf32>
    %4 = vector.broadcast %3 : vector<1x128xf32> to vector<8x128xf32>
    %5 = arith.addf %2, %4 : vector<8x128xf32>
    %cst_5 = arith.constant 0.000000e+00 : f32
    %6 = vector.broadcast %cst_5 : f32 to vector<8x128xf32>
    %7 = arith.cmpf ogt, %5, %6 : vector<8x128xf32>
    %8 = math.exp %5 : vector<8x128xf32>
    %cst_6 = arith.constant 1.000000e+00 : f32
    %9 = vector.broadcast %cst_6 : f32 to vector<8x128xf32>
    %10 = arith.subf %8, %9 : vector<8x128xf32>
    %cst_7 = arith.constant 1.67326319 : f32
    %11 = vector.broadcast %cst_7 : f32 to vector<8x128xf32>
    %12 = arith.mulf %11, %10 : vector<8x128xf32>
    %13 = arith.select %7, %5, %12 : vector<8x128xi1>, vector<8x128xf32>
    %cst_8 = arith.constant 1.05070102 : f32
    %14 = vector.broadcast %cst_8 : f32 to vector<8x128xf32>
    %15 = arith.mulf %14, %13 : vector<8x128xf32>
    %c0_9 = arith.constant 0 : index
    %c0_10 = arith.constant 0 : index
    %16 = vector.load %arg4[%c0_9, %c0_10] : memref<128x128xf32, #tpu.memory_space<vmem>>, vector<128x128xf32>
    %cst_11 = arith.constant dense<0.000000e+00> : vector<8x128xf32>
    %17 = tpu.matmul %15, %16, %cst_11 {dimension_numbers = #tpu.dot_dimension_numbers<[1], [0], [0], [1], [0, 0, 1, 1], [], []>} : vector<8x128xf32>, vector<128x128xf32>, vector<8x128xf32> -> vector<8x128xf32>
    %c0_12 = arith.constant 0 : index
    %c0_13 = arith.constant 0 : index
    %18 = vector.load %arg5[%c0_12, %c0_13] : memref<1x128xf32, #tpu.memory_space<vmem>>, vector<1x128xf32>
    %19 = vector.broadcast %18 : vector<1x128xf32> to vector<8x128xf32>
    %20 = arith.addf %17, %19 : vector<8x128xf32>
    %cst_14 = arith.constant 0.000000e+00 : f32
    %21 = vector.broadcast %cst_14 : f32 to vector<8x128xf32>
    %22 = arith.cmpf ogt, %20, %21 : vector<8x128xf32>
    %23 = math.exp %20 : vector<8x128xf32>
    %cst_15 = arith.constant 1.000000e+00 : f32
    %24 = vector.broadcast %cst_15 : f32 to vector<8x128xf32>
    %25 = arith.subf %23, %24 : vector<8x128xf32>
    %cst_16 = arith.constant 1.67326319 : f32
    %26 = vector.broadcast %cst_16 : f32 to vector<8x128xf32>
    %27 = arith.mulf %26, %25 : vector<8x128xf32>
    %28 = arith.select %22, %20, %27 : vector<8x128xi1>, vector<8x128xf32>
    %cst_17 = arith.constant 1.05070102 : f32
    %29 = vector.broadcast %cst_17 : f32 to vector<8x128xf32>
    %30 = arith.mulf %29, %28 : vector<8x128xf32>
    %c0_18 = arith.constant 0 : index
    %c0_19 = arith.constant 0 : index
    %31 = vector.load %arg6[%c0_18, %c0_19] : memref<128x128xf32, #tpu.memory_space<vmem>>, vector<128x128xf32>
    %cst_20 = arith.constant dense<0.000000e+00> : vector<8x128xf32>
    %32 = tpu.matmul %30, %31, %cst_20 {dimension_numbers = #tpu.dot_dimension_numbers<[1], [0], [0], [1], [0, 0, 1, 1], [], []>} : vector<8x128xf32>, vector<128x128xf32>, vector<8x128xf32> -> vector<8x128xf32>
    %c0_21 = arith.constant 0 : index
    %c0_22 = arith.constant 0 : index
    %33 = vector.load %arg7[%c0_21, %c0_22] : memref<1x128xf32, #tpu.memory_space<vmem>>, vector<1x128xf32>
    %34 = vector.broadcast %33 : vector<1x128xf32> to vector<8x128xf32>
    %35 = arith.addf %32, %34 : vector<8x128xf32>
    %c0_23 = arith.constant 0 : index
    %c0_24 = arith.constant 0 : index
    %36 = vector.load %arg8[%c0_23, %c0_24] : memref<8x128xf32, #tpu.memory_space<vmem>>, vector<8x128xf32>
    tpu.vector_store %arg8[%c0_23, %c0_24], %35 {strides = array<i32>} : memref<8x128xf32, #tpu.memory_space<vmem>>, vector<8x128xf32>,
    return
  }
  func.func @transform_0(%arg0: i32) -> (i32, i32) {
    %c0_i32 = arith.constant 0 : i32
    %c0_i32_0 = arith.constant 0 : i32
    return %arg0, %c0_i32 : i32, i32
  }
  func.func @transform_1(%arg0: i32) -> (i32, i32) {
    %c0_i32 = arith.constant 0 : i32
    %c0_i32_0 = arith.constant 0 : i32
    %c0_i32_1 = arith.constant 0 : i32
    return %c0_i32, %c0_i32_0 : i32, i32
  }
  func.func @transform_2(%arg0: i32) -> (i32, i32) {
    %c0_i32 = arith.constant 0 : i32
    %c0_i32_0 = arith.constant 0 : i32
    %c0_i32_1 = arith.constant 0 : i32
    return %c0_i32, %c0_i32_0 : i32, i32
  }
  func.func @transform_3(%arg0: i32) -> (i32, i32) {
    %c0_i32 = arith.constant 0 : i32
    %c0_i32_0 = arith.constant 0 : i32
    %c0_i32_1 = arith.constant 0 : i32
    return %c0_i32, %c0_i32_0 : i32, i32
  }
  func.func @transform_4(%arg0: i32) -> (i32, i32) {
    %c0_i32 = arith.constant 0 : i32
    %c0_i32_0 = arith.constant 0 : i32
    %c0_i32_1 = arith.constant 0 : i32
    return %c0_i32, %c0_i32_0 : i32, i32
  }
  func.func @transform_5(%arg0: i32) -> (i32, i32) {
    %c0_i32 = arith.constant 0 : i32
    %c0_i32_0 = arith.constant 0 : i32
    %c0_i32_1 = arith.constant 0 : i32
    return %c0_i32, %c0_i32_0 : i32, i32
  }
  func.func @transform_6(%arg0: i32) -> (i32, i32) {
    %c0_i32 = arith.constant 0 : i32
    %c0_i32_0 = arith.constant 0 : i32
    %c0_i32_1 = arith.constant 0 : i32
    return %c0_i32, %c0_i32_0 : i32, i32
  }
  func.func @transform_7(%arg0: i32) -> (i32, i32) {
    %c0_i32 = arith.constant 0 : i32
    %c0_i32_0 = arith.constant 0 : i32
    return %arg0, %c0_i32 : i32, i32
  }
}

module attributes {stable_mosaic.version = 11 : i64} {
  func.func @weaknet_kernel(%arg0: i32, %arg1: memref<8x128xf32, #tpu.memory_space<vmem>>, %arg2: memref<128x128xf32, #tpu.memory_space<vmem>>, %arg3: memref<1x128xf32, #tpu.memory_space<vmem>>, %arg4: memref<128x128xf32, #tpu.memory_space<vmem>>, %arg5: memref<1x128xf32, #tpu.memory_space<vmem>>, %arg6: memref<128x128xf32, #tpu.memory_space<vmem>>, %arg7: memref<1x128xf32, #tpu.memory_space<vmem>>, %arg8: memref<8x128xf32, #tpu.memory_space<vmem>>) attributes {dimension_semantics = [#tpu.dimension_semantics<parallel>], iteration_bounds = array<i64: 2>, scalar_prefetch = 0 : i64, scratch_operands = 0 : i64, tpu.core_type = #tpu.core_type<tc>, window_params = [{transform_indices = @transform_0, window_bounds = array<i64: 8, 128>}, {pipeline_mode = #tpu.pipeline_mode<synchronous>, transform_indices = @transform_1, window_bounds = array<i64: 128, 128>}, {pipeline_mode = #tpu.pipeline_mode<synchronous>, transform_indices = @transform_2, window_bounds = array<i64: 1, 128>}, {pipeline_mode = #tpu.pipeline_mode<synchronous>, transform_indices = @transform_3, window_bounds = array<i64: 128, 128>}, {pipeline_mode = #tpu.pipeline_mode<synchronous>, transform_indices = @transform_4, window_bounds = array<i64: 1, 128>}, {pipeline_mode = #tpu.pipeline_mode<synchronous>, transform_indices = @transform_5, window_bounds = array<i64: 128, 128>}, {pipeline_mode = #tpu.pipeline_mode<synchronous>, transform_indices = @transform_6, window_bounds = array<i64: 1, 128>}, {transform_indices = @transform_7, window_bounds = array<i64: 8, 128>}]} {
    %c0 = arith.constant 0 : index
    %c0_0 = arith.constant 0 : index
    %0 = vector.load %arg1[%c0, %c0_0] : memref<8x128xf32, #tpu.memory_space<vmem>>, vector<8x128xf32>
    %c0_1 = arith.constant 0 : index
    %c0_2 = arith.constant 0 : index
    %1 = vector.load %arg2[%c0_1, %c0_2] : memref<128x128xf32, #tpu.memory_space<vmem>>, vector<128x128xf32>
    %cst = arith.constant dense<0.000000e+00> : vector<8x128xf32>
    %2 = tpu.matmul %0, %1, %cst {dimension_numbers = #tpu.dot_dimension_numbers<[1], [0], [0], [1], [0, 0, 1, 1], [], []>} : vector<8x128xf32>, vector<128x128xf32>, vector<8x128xf32> -> vector<8x128xf32>
    %c0_3 = arith.constant 0 : index
    %c0_4 = arith.constant 0 : index
    %3 = vector.load %arg3[%c0_3, %c0_4] : memref<1x128xf32, #tpu.memory_space<vmem>>, vector<1x128xf32>
    %4 = vector.broadcast %3 : vector<1x128xf32> to vector<8x128xf32>
    %5 = arith.addf %2, %4 : vector<8x128xf32>
    %cst_5 = arith.constant 0.000000e+00 : f32
    %6 = vector.broadcast %cst_5 : f32 to vector<8x128xf32>
    %7 = arith.cmpf ogt, %5, %6 : vector<8x128xf32>
    %8 = math.exp %5 : vector<8x128xf32>
    %cst_6 = arith.constant 1.000000e+00 : f32
    %9 = vector.broadcast %cst_6 : f32 to vector<8x128xf32>
    %10 = arith.subf %8, %9 : vector<8x128xf32>
    %cst_7 = arith.constant 1.67326319 : f32
    %11 = vector.broadcast %cst_7 : f32 to vector<8x128xf32>
    %12 = arith.mulf %11, %10 : vector<8x128xf32>
    %13 = arith.select %7, %5, %12 : vector<8x128xi1>, vector<8x128xf32>
    %cst_8 = arith.constant 1.05070102 : f32
    %14 = vector.broadcast %cst_8 : f32 to vector<8x128xf32>
    %15 = arith.mulf %14, %13 : vector<8x128xf32>
    %c0_9 = arith.constant 0 : index
    %c0_10 = arith.constant 0 : index
    %16 = vector.load %arg4[%c0_9, %c0_10] : memref<128x128xf32, #tpu.memory_space<vmem>>, vector<128x128xf32>
    %cst_11 = arith.constant dense<0.000000e+00> : vector<8x128xf32>
    %17 = tpu.matmul %15, %16, %cst_11 {dimension_numbers = #tpu.dot_dimension_numbers<[1], [0], [0], [1], [0, 0, 1, 1], [], []>} : vector<8x128xf32>, vector<128x128xf32>, vector<8x128xf32> -> vector<8x128xf32>
    %c0_12 = arith.constant 0 : index
    %c0_13 = arith.constant 0 : index
    %18 = vector.load %arg5[%c0_12, %c0_13] : memref<1x128xf32, #tpu.memory_space<vmem>>, vector<1x128xf32>
    %19 = vector.broadcast %18 : vector<1x128xf32> to vector<8x128xf32>
    %20 = arith.addf %17, %19 : vector<8x128xf32>
    %cst_14 = arith.constant 0.000000e+00 : f32
    %21 = vector.broadcast %cst_14 : f32 to vector<8x128xf32>
    %22 = arith.cmpf ogt, %20, %21 : vector<8x128xf32>
    %23 = math.exp %20 : vector<8x128xf32>
    %cst_15 = arith.constant 1.000000e+00 : f32
    %24 = vector.broadcast %cst_15 : f32 to vector<8x128xf32>
    %25 = arith.subf %23, %24 : vector<8x128xf32>
    %cst_16 = arith.constant 1.67326319 : f32
    %26 = vector.broadcast %cst_16 : f32 to vector<8x128xf32>
    %27 = arith.mulf %26, %25 : vector<8x128xf32>
    %28 = arith.select %22, %20, %27 : vector<8x128xi1>, vector<8x128xf32>
    %cst_17 = arith.constant 1.05070102 : f32
    %29 = vector.broadcast %cst_17 : f32 to vector<8x128xf32>
    %30 = arith.mulf %29, %28 : vector<8x128xf32>
    %c0_18 = arith.constant 0 : index
    %c0_19 = arith.constant 0 : index
    %31 = vector.load %arg6[%c0_18, %c0_19] : memref<128x128xf32, #tpu.memory_space<vmem>>, vector<128x128xf32>
    %cst_20 = arith.constant dense<0.000000e+00> : vector<8x128xf32>
    %32 = tpu.matmul %30, %31, %cst_20 {dimension_numbers = #tpu.dot_dimension_numbers<[1], [0], [0], [1], [0, 0, 1, 1], [], []>} : vector<8x128xf32>, vector<128x128xf32>, vector<8x128xf32> -> vector<8x128xf32>
    %c0_21 = arith.constant 0 : index
    %c0_22 = arith.constant 0 : index
    %33 = vector.load %arg7[%c0_21, %c0_22] : memref<1x128xf32, #tpu.memory_space<vmem>>, vector<1x128xf32>
    %34 = vector.broadcast %33 : vector<1x128xf32> to vector<8x128xf32>
    %35 = arith.addf %32, %34 : vector<8x128xf32>
    %c0_23 = arith.constant 0 : index
    %c0_24 = arith.constant 0 : index
    %36 = vector.load %arg8[%c0_23, %c0_24] : memref<8x128xf32, #tpu.memory_space<vmem>>, vector<8x128xf32>
    tpu.vector_store %arg8[%c0_23, %c0_24], %35 {strides = array<i32>} : memref<8x128xf32, #tpu.memory_space<vmem>>, vector<8x128xf32>,
    return
  }
  func.func @transform_0(%arg0: i32) -> (i32, i32) {
    %c0_i32 = arith.constant 0 : i32
    %c0_i32_0 = arith.constant 0 : i32
    return %arg0, %c0_i32 : i32, i32
  }
  func.func @transform_1(%arg0: i32) -> (i32, i32) {
    %c0_i32 = arith.constant 0 : i32
    %c0_i32_0 = arith.constant 0 : i32
    %c0_i32_1 = arith.constant 0 : i32
    return %c0_i32, %c0_i32_0 : i32, i32
  }
  func.func @transform_2(%arg0: i32) -> (i32, i32) {
    %c0_i32 = arith.constant 0 : i32
    %c0_i32_0 = arith.constant 0 : i32
    %c0_i32_1 = arith.constant 0 : i32
    return %c0_i32, %c0_i32_0 : i32, i32
  }
  func.func @transform_3(%arg0: i32) -> (i32, i32) {
    %c0_i32 = arith.constant 0 : i32
    %c0_i32_0 = arith.constant 0 : i32
    %c0_i32_1 = arith.constant 0 : i32
    return %c0_i32, %c0_i32_0 : i32, i32
  }
  func.func @transform_4(%arg0: i32) -> (i32, i32) {
    %c0_i32 = arith.constant 0 : i32
    %c0_i32_0 = arith.constant 0 : i32
    %c0_i32_1 = arith.constant 0 : i32
    return %c0_i32, %c0_i32_0 : i32, i32
  }
  func.func @transform_5(%arg0: i32) -> (i32, i32) {
    %c0_i32 = arith.constant 0 : i32
    %c0_i32_0 = arith.constant 0 : i32
    %c0_i32_1 = arith.constant 0 : i32
    return %c0_i32, %c0_i32_0 : i32, i32
  }
  func.func @transform_6(%arg0: i32) -> (i32, i32) {
    %c0_i32 = arith.constant 0 : i32
    %c0_i32_0 = arith.constant 0 : i32
    %c0_i32_1 = arith.constant 0 : i32
    return %c0_i32, %c0_i32_0 : i32, i32
  }
  func.func @transform_7(%arg0: i32) -> (i32, i32) {
    %c0_i32 = arith.constant 0 : i32
    %c0_i32_0 = arith.constant 0 : i32
    return %arg0, %c0_i32 : i32, i32
  }
}

</mosaic_0001>

<llo_original>
// kernel: tpu_custom_call.1
$region0: #{tpu_custom_call.1}
  #allocation0 [shape = 'u32[]', space=smem, size = 0x4, offset = 0x4, fixed_abs, tag = 'smem constant byte address 0x4 - core index']
  #allocation1 [shape = 'u32[72,128]{1,0:T(1,128)}', space=vmem, size = 0x9000, scoped, tag = 'internal scratch']
  %s0 = inlined_call_operand.hbm [shape: f32[16,128], index: 0, kind: input, shape index: {}]
  %s1 = inlined_call_operand.hbm [shape: f32[128,128], index: 1, kind: input, shape index: {}]
  %s2 = inlined_call_operand.vmem [shape: f32[1,128], index: 2, kind: input, shape index: {}]
  %s3 = inlined_call_operand.hbm [shape: f32[128,128], index: 3, kind: input, shape index: {}]
  %s4 = inlined_call_operand.vmem [shape: f32[1,128], index: 4, kind: input, shape index: {}]
  %s5 = inlined_call_operand.hbm [shape: f32[128,128], index: 5, kind: input, shape index: {}]
  %s6 = inlined_call_operand.vmem [shape: f32[1,128], index: 6, kind: input, shape index: {}]
  %s7 = inlined_call_operand.hbm [shape: f32[16,128], index: 7, kind: output, shape index: {}]
  %s8 = sld [smem:[#allocation0]]
  $region77: #{tpu_custom_call.1} parent=0
    _
  %s10 = ssub.s32 1, %s8
  %s11 = scalar_select 0, %s10, %s8
  $region1: #{tpu_custom_call.1} parent=0
    #allocation2 [shape = 'u8[8192]{0}', space=vmem, size = 0x2000, scoped, tag = 'input window, operand 0']
    #allocation3 [shape = 's32[2]{0}', space=sflag, size = 0x8, scoped, tag = 'scoped memory for tpu_custom_call.1']
    #allocation4 [shape = 's32[2]{0}', space=sflag, size = 0x8, scoped, tag = 'scoped memory for tpu_custom_call.1']
    #allocation5 [shape = 'u8[65536]{0}', space=vmem, size = 0x10000, scoped, tag = 'input window, operand 1, single buffered']
    #allocation6 [shape = 's32[1]{0}', space=sflag, size = 0x4, scoped, tag = 'scoped memory for tpu_custom_call.1']
    #allocation7 [shape = 'u8[65536]{0}', space=vmem, size = 0x10000, scoped, tag = 'input window, operand 3, single buffered']
    #allocation8 [shape = 'u8[65536]{0}', space=vmem, size = 0x10000, scoped, tag = 'input window, operand 5, single buffered']
    #allocation9 [shape = 's32[1]{0}', space=sflag, size = 0x4, scoped, tag = 'scoped memory for tpu_custom_call.1']
    #allocation10 [shape = 'u8[8192]{0}', space=vmem, size = 0x2000, scoped, tag = 'output window, operand 0']
    %12 = vsyncpa [#allocation3], 0
    %s13 = scalar_lea.sflag [#allocation3], 1
    %14 = vsyncpa %s13, 0
    %15 = vsyncpa [#allocation6], 0
    %16 = vsyncpa [#allocation9], 0
    %17 = vsyncpa [#allocation4], 0
    %s18 = scalar_lea.sflag [#allocation4], 1
    %19 = vsyncpa %s18, 0
    loop: start=0, step=1, limit=4
    $region2: #{tpu_custom_call.1} parent=1 // loop_pre_header
      _
    $region3: #{tpu_custom_call.1} parent=1 // loop_header
      %s21 = sphi 0, %s25
      %p22 = scmp.ge.s32.totalorder %s21, 4
      %s31 = sphi 0, %s33
      %s34 = sphi 0, %s31
      %s35 = sphi 0, %s34
      %s51 = sphi 0, %s35
      %s55 = sphi 0, %s55
      %s57 = sphi 0, %s55
      %s58 = sphi 0, %s57
      %s72 = sphi 0, %s58
      %s76 = sphi 0, %s76
      %s78 = sphi 0, %s76
      %s79 = sphi 0, %s78
      %s93 = sphi 0, %s79
      %s97 = sphi 0, %s97
      %s99 = sphi 0, %s97
      %s100 = sphi 0, %s99
      %s114 = sphi 0, %s100
      %s118 = sphi 0, %s118
      %s120 = sphi 0, %s118
      %s121 = sphi 0, %s120
      %s135 = sphi 0, %s121
      %s139 = sphi 0, %s139
      %s141 = sphi 0, %s139
      %s142 = sphi 0, %s141
      %s156 = sphi 0, %s142
      %s160 = sphi 0, %s160
      %s162 = sphi 0, %s160
      %s163 = sphi 0, %s162
      %s177 = sphi 0, %s163
      %s183 = sphi 0, %s185
      %s186 = sphi 0, %s183
      %s187 = sphi 0, %s186
      %s203 = sphi 0, %s187
    $region4: #{tpu_custom_call.1} parent=1 // loop_header_branch
      %24 = sbr.rel (%p22) target = $region8
    $region5: #{tpu_custom_call.1} parent=1 // loop_body
      %s26 = ssub.s32 %s21, 1
      %s27 = ssub.s32 %s21, 2
      %s28 = sadd.s32 %s21, 1
      %s29 = ssub.s32 %s21, %s28
      %p30 = scmp.eq.s32.totalorder %s29, 0
      %s32 = sadd.s32 %s31, 1
      %s33 = scalar_select %p30, %s31, %s32
      %p36 = pneg %p30
      %p37 = scmp.eq.s32.totalorder %s21, 1
      %p38 = por %p36, %p37
      %p39 = scmp.ne.s32.totalorder %s31, %s34
      %p40 = scmp.eq.s32.totalorder %s21, 0
      %p41 = por %p39, %p40
      %p42 = scmp.ne.s32.totalorder %s31, %s34
      %p43 = scmp.eq.s32.totalorder %s26, 1
      %p44 = por %p42, %p43
      %p45 = scmp.ne.s32.totalorder %s34, %s35
      %p46 = scmp.eq.s32.totalorder %s26, 0
      %p47 = por %p45, %p46
      %p48 = scmp.ne.s32.totalorder %s34, %s35
      %p49 = scmp.eq.s32.totalorder %s27, 1
      %p50 = por %p48, %p49
      %p52 = scmp.ne.s32.totalorder %s35, %s51
      %p53 = scmp.eq.s32.totalorder %s27, 0
      %p54 = por %p52, %p53
      %s56 = sadd.s32 %s55, 1
      %p59 = scmp.eq.s32.totalorder %s21, 1
      %p60 = scmp.ne.s32.totalorder %s55, %s57
      %p61 = scmp.eq.s32.totalorder %s21, 0
      %p62 = por %p60, %p61
      %p63 = scmp.ne.s32.totalorder %s55, %s57
      %p64 = scmp.eq.s32.totalorder %s26, 1
      %p65 = por %p63, %p64
      %p66 = scmp.ne.s32.totalorder %s57, %s58
      %p67 = scmp.eq.s32.totalorder %s26, 0
      %p68 = por %p66, %p67
      %p69 = scmp.ne.s32.totalorder %s57, %s58
      %p70 = scmp.eq.s32.totalorder %s27, 1
      %p71 = por %p69, %p70
      %p73 = scmp.ne.s32.totalorder %s58, %s72
      %p74 = scmp.eq.s32.totalorder %s27, 0
      %p75 = por %p73, %p74
      %s77 = sadd.s32 %s76, 1
      %p80 = scmp.eq.s32.totalorder %s21, 1
      %p81 = scmp.ne.s32.totalorder %s76, %s78
      %p82 = scmp.eq.s32.totalorder %s21, 0
      %p83 = por %p81, %p82
      %p84 = scmp.ne.s32.totalorder %s76, %s78
      %p85 = scmp.eq.s32.totalorder %s26, 1
      %p86 = por %p84, %p85
      %p87 = scmp.ne.s32.totalorder %s78, %s79
      %p88 = scmp.eq.s32.totalorder %s26, 0
      %p89 = por %p87, %p88
      %p90 = scmp.ne.s32.totalorder %s78, %s79
      %p91 = scmp.eq.s32.totalorder %s27, 1
      %p92 = por %p90, %p91
      %p94 = scmp.ne.s32.totalorder %s79, %s93
      %p95 = scmp.eq.s32.totalorder %s27, 0
      %p96 = por %p94, %p95
      %s98 = sadd.s32 %s97, 1
      %p101 = scmp.eq.s32.totalorder %s21, 1
      %p102 = scmp.ne.s32.totalorder %s97, %s99
      %p103 = scmp.eq.s32.totalorder %s21, 0
      %p104 = por %p102, %p103
      %p105 = scmp.ne.s32.totalorder %s97, %s99
      %p106 = scmp.eq.s32.totalorder %s26, 1
      %p107 = por %p105, %p106
      %p108 = scmp.ne.s32.totalorder %s99, %s100
      %p109 = scmp.eq.s32.totalorder %s26, 0
      %p110 = por %p108, %p109
      %p111 = scmp.ne.s32.totalorder %s99, %s100
      %p112 = scmp.eq.s32.totalorder %s27, 1
      %p113 = por %p111, %p112
      %p115 = scmp.ne.s32.totalorder %s100, %s114
      %p116 = scmp.eq.s32.totalorder %s27, 0
      %p117 = por %p115, %p116
      %s119 = sadd.s32 %s118, 1
      %p122 = scmp.eq.s32.totalorder %s21, 1
      %p123 = scmp.ne.s32.totalorder %s118, %s120
      %p124 = scmp.eq.s32.totalorder %s21, 0
      %p125 = por %p123, %p124
      %p126 = scmp.ne.s32.totalorder %s118, %s120
      %p127 = scmp.eq.s32.totalorder %s26, 1
      %p128 = por %p126, %p127
      %p129 = scmp.ne.s32.totalorder %s120, %s121
      %p130 = scmp.eq.s32.totalorder %s26, 0
      %p131 = por %p129, %p130
      %p132 = scmp.ne.s32.totalorder %s120, %s121
      %p133 = scmp.eq.s32.totalorder %s27, 1
      %p134 = por %p132, %p133
      %p136 = scmp.ne.s32.totalorder %s121, %s135
      %p137 = scmp.eq.s32.totalorder %s27, 0
      %p138 = por %p136, %p137
      %s140 = sadd.s32 %s139, 1
      %p143 = scmp.eq.s32.totalorder %s21, 1
      %p144 = scmp.ne.s32.totalorder %s139, %s141
      %p145 = scmp.eq.s32.totalorder %s21, 0
      %p146 = por %p144, %p145
      %p147 = scmp.ne.s32.totalorder %s139, %s141
      %p148 = scmp.eq.s32.totalorder %s26, 1
      %p149 = por %p147, %p148
      %p150 = scmp.ne.s32.totalorder %s141, %s142
      %p151 = scmp.eq.s32.totalorder %s26, 0
      %p152 = por %p150, %p151
      %p153 = scmp.ne.s32.totalorder %s141, %s142
      %p154 = scmp.eq.s32.totalorder %s27, 1
      %p155 = por %p153, %p154
      %p157 = scmp.ne.s32.totalorder %s142, %s156
      %p158 = scmp.eq.s32.totalorder %s27, 0
      %p159 = por %p157, %p158
      %s161 = sadd.s32 %s160, 1
      %p164 = scmp.eq.s32.totalorder %s21, 1
      %p165 = scmp.ne.s32.totalorder %s160, %s162
      %p166 = scmp.eq.s32.totalorder %s21, 0
      %p167 = por %p165, %p166
      %p168 = scmp.ne.s32.totalorder %s160, %s162
      %p169 = scmp.eq.s32.totalorder %s26, 1
      %p170 = por %p168, %p169
      %p171 = scmp.ne.s32.totalorder %s162, %s163
      %p172 = scmp.eq.s32.totalorder %s26, 0
      %p173 = por %p171, %p172
      %p174 = scmp.ne.s32.totalorder %s162, %s163
      %p175 = scmp.eq.s32.totalorder %s27, 1
      %p176 = por %p174, %p175
      %p178 = scmp.ne.s32.totalorder %s163, %s177
      %p179 = scmp.eq.s32.totalorder %s27, 0
      %p180 = por %p178, %p179
      %s181 = ssub.s32 %s21, %s28
      %p182 = scmp.eq.s32.totalorder %s181, 0
      %s184 = sadd.s32 %s183, 1
      %s185 = scalar_select %p182, %s183, %s184
      %p188 = pneg %p182
      %p189 = scmp.eq.s32.totalorder %s21, 1
      %p190 = por %p188, %p189
      %p191 = scmp.ne.s32.totalorder %s183, %s186
      %p192 = scmp.eq.s32.totalorder %s21, 0
      %p193 = por %p191, %p192
      %p194 = scmp.ne.s32.totalorder %s183, %s186
      %p195 = scmp.eq.s32.totalorder %s26, 1
      %p196 = por %p194, %p195
      %p197 = scmp.ne.s32.totalorder %s186, %s187
      %p198 = scmp.eq.s32.totalorder %s26, 0
      %p199 = por %p197, %p198
      %p200 = scmp.ne.s32.totalorder %s186, %s187
      %p201 = scmp.eq.s32.totalorder %s27, 1
      %p202 = por %p200, %p201
      %p204 = scmp.ne.s32.totalorder %s187, %s203
      %p205 = scmp.eq.s32.totalorder %s27, 0
      %p206 = por %p204, %p205
      %p207 = scmp.le.s32.totalorder 1, %s21
      %p208 = scmp.lt.s32.totalorder %s21, 3
      %p209 = pnand %p207, %p208
      %p210 = pneg %p209
      // Predicated region
      $region9: #{tpu_custom_call.1} parent=5 // pred_check
        _
      $region10: #{tpu_custom_call.1} parent=5 // pred_check_branch
        %212 = sbr.rel (%p209) target = $region12
      $region11: #{tpu_custom_call.1} parent=5 // pred_region
        %s213 = ssub.s32 %s21, 1
        // Predicated region
        $region13: #{tpu_custom_call.1} parent=11 // pred_check
          %p214 = pneg %p68
        $region14: #{tpu_custom_call.1} parent=11 // pred_check_branch
          %216 = sbr.rel (%p214) target = $region16
        $region15: #{tpu_custom_call.1} parent=11 // pred_region
          %218 = vsyncadd [#allocation6], 0
          %s219 = sshll.u32 %s1, 4
          %s220 = int_to_ptr.hbm [resolvable:$true] %s219
          %s221 = sshll.u32 [#allocation5], 4
          %s222 = int_to_ptr.vmem [resolvable:$true] %s221
          %227 = dma.hbm_to_vmem [thread:$0]  %s220, 2048, %s222, [#allocation6], 128, 128, 8
        $region16: #{tpu_custom_call.1} parent=11 // pred_fallthru
          _
        // Predicated region
        $region17: #{tpu_custom_call.1} parent=11 // pred_check
          %p228 = pneg %p89
        $region18: #{tpu_custom_call.1} parent=11 // pred_check_branch
          %230 = sbr.rel (%p228) target = $region20
        $region19: #{tpu_custom_call.1} parent=11 // pred_region
          _
        $region20: #{tpu_custom_call.1} parent=11 // pred_fallthru
          _
        // Predicated region
        $region21: #{tpu_custom_call.1} parent=11 // pred_check
          %p231 = pneg %p110
        $region22: #{tpu_custom_call.1} parent=11 // pred_check_branch
          %233 = sbr.rel (%p231) target = $region24
        $region23: #{tpu_custom_call.1} parent=11 // pred_region
          %235 = vsyncadd [#allocation6], 0
          %s236 = sshll.u32 %s3, 4
          %s237 = int_to_ptr.hbm [resolvable:$true] %s236
          %s238 = sshll.u32 [#allocation7], 4
          %s239 = int_to_ptr.vmem [resolvable:$true] %s238
          %244 = dma.hbm_to_vmem [thread:$0]  %s237, 2048, %s239, [#allocation6], 128, 128, 8
        $region24: #{tpu_custom_call.1} parent=11 // pred_fallthru
          _
        // Predicated region
        $region25: #{tpu_custom_call.1} parent=11 // pred_check
          %p245 = pneg %p131
        $region26: #{tpu_custom_call.1} parent=11 // pred_check_branch
          %247 = sbr.rel (%p245) target = $region28
        $region27: #{tpu_custom_call.1} parent=11 // pred_region
          _
        $region28: #{tpu_custom_call.1} parent=11 // pred_fallthru
          _
        // Predicated region
        $region29: #{tpu_custom_call.1} parent=11 // pred_check
          %p248 = pneg %p152
        $region30: #{tpu_custom_call.1} parent=11 // pred_check_branch
          %250 = sbr.rel (%p248) target = $region32
        $region31: #{tpu_custom_call.1} parent=11 // pred_region
          %252 = vsyncadd [#allocation9], 0
          %s253 = sshll.u32 %s5, 4
          %s254 = int_to_ptr.hbm [resolvable:$true] %s253
          %s255 = sshll.u32 [#allocation8], 4
          %s256 = int_to_ptr.vmem [resolvable:$true] %s255
          %261 = dma.hbm_to_vmem [thread:$0]  %s254, 2048, %s256, [#allocation9], 128, 128, 8
        $region32: #{tpu_custom_call.1} parent=11 // pred_fallthru
          _
        // Predicated region
        $region33: #{tpu_custom_call.1} parent=11 // pred_check
          %p262 = pneg %p173
        $region34: #{tpu_custom_call.1} parent=11 // pred_check_branch
          %264 = sbr.rel (%p262) target = $region36
        $region35: #{tpu_custom_call.1} parent=11 // pred_region
          _
        $region36: #{tpu_custom_call.1} parent=11 // pred_fallthru
          _
      $region12: #{tpu_custom_call.1} parent=5 // pred_fallthru
        _
      %p265 = scmp.lt.s32.totalorder %s21, 2
      // Predicated region
      $region37: #{tpu_custom_call.1} parent=5 // pred_check
        %p266 = pneg %p265
      $region38: #{tpu_custom_call.1} parent=5 // pred_check_branch
        %268 = sbr.rel (%p266) target = $region40
      $region39: #{tpu_custom_call.1} parent=5 // pred_region
        // Predicated region
        $region41: #{tpu_custom_call.1} parent=39 // pred_check
          %p269 = pneg %p41
        $region42: #{tpu_custom_call.1} parent=39 // pred_check_branch
          %271 = sbr.rel (%p269) target = $region44
        $region43: #{tpu_custom_call.1} parent=39 // pred_region
          %s272 = sand.u32 %s31, 1
          %s273 = scalar_lea.sflag [#allocation3], %s272
          %s274 = sand.u32 %s31, 1
          %s275 = smul.addr %s274, 8
          %s276 = scalar_lea.vmem [#allocation2], %s275
          %278 = vsyncadd %s273, 0
          %s279 = smul.addr %s21, 8
          %s280 = scalar_lea.hbm %s0, %s279
          %s282 = sshll.u32 %s280, 4
          %s283 = int_to_ptr.hbm [resolvable:$true] %s282
          %s284 = sshll.u32 %s276, 4
          %s285 = int_to_ptr.vmem [resolvable:$true] %s284
          %287 = dma.hbm_to_vmem [thread:$0]  %s283, 128, %s285, %s273
        $region44: #{tpu_custom_call.1} parent=39 // pred_fallthru
          _
      $region40: #{tpu_custom_call.1} parent=5 // pred_fallthru
        _
      %p288 = scmp.le.s32.totalorder 1, %s21
      %p289 = scmp.lt.s32.totalorder %s21, 3
      %p290 = pnand %p288, %p289
      %p291 = pneg %p290
      // Predicated region
      $region45: #{tpu_custom_call.1} parent=5 // pred_check
        _
      $region46: #{tpu_custom_call.1} parent=5 // pred_check_branch
        %293 = sbr.rel (%p290) target = $region48
      $region47: #{tpu_custom_call.1} parent=5 // pred_region
        %s294 = ssub.s32 %s21, 1
        %s295 = sand.u32 %s34, 1
        %s296 = scalar_lea.sflag [#allocation3], %s295
        %s297 = sand.u32 %s34, 1
        %s298 = smul.addr %s297, 8
        %s299 = scalar_lea.vmem [#allocation2], %s298
        // Predicated region
        $region49: #{tpu_custom_call.1} parent=47 // pred_check
          %p300 = pneg %p47
        $region50: #{tpu_custom_call.1} parent=47 // pred_check_branch
          %302 = sbr.rel (%p300) target = $region52
        $region51: #{tpu_custom_call.1} parent=47 // pred_region
          %304 = dma.done %s296, 128
        $region52: #{tpu_custom_call.1} parent=47 // pred_fallthru
          _
        // Predicated region
        $region53: #{tpu_custom_call.1} parent=47 // pred_check
          %p305 = pneg %p68
        $region54: #{tpu_custom_call.1} parent=47 // pred_check_branch
          %307 = sbr.rel (%p305) target = $region56
        $region55: #{tpu_custom_call.1} parent=47 // pred_region
          %309 = dma.done [#allocation6], 2048
        $region56: #{tpu_custom_call.1} parent=47 // pred_fallthru
          _
        // Predicated region
        $region57: #{tpu_custom_call.1} parent=47 // pred_check
          %p310 = pneg %p110
        $region58: #{tpu_custom_call.1} parent=47 // pred_check_branch
          %312 = sbr.rel (%p310) target = $region60
        $region59: #{tpu_custom_call.1} parent=47 // pred_region
          %314 = dma.done [#allocation6], 2048
        $region60: #{tpu_custom_call.1} parent=47 // pred_fallthru
          _
        // Predicated region
        $region61: #{tpu_custom_call.1} parent=47 // pred_check
          %p315 = pneg %p152
        $region62: #{tpu_custom_call.1} parent=47 // pred_check_branch
          %317 = sbr.rel (%p315) target = $region64
        $region63: #{tpu_custom_call.1} parent=47 // pred_region
          %319 = dma.done [#allocation9], 2048
        $region64: #{tpu_custom_call.1} parent=47 // pred_fallthru
          _
        %s320 = sand.u32 %s34, 1
        %s321 = scalar_lea.sflag [#allocation3], %s320
        %s322 = sand.u32 %s34, 1
        %s323 = smul.addr %s322, 8
        %s324 = scalar_lea.vmem [#allocation2], %s323
        %p325 = pneg %p47
        %p326 = pneg %p44
        %p327 = pneg %p68
        %p328 = pneg %p65
        %p329 = pneg %p89
        %p330 = pneg %p86
        %p331 = pneg %p110
        %p332 = pneg %p107
        %p333 = pneg %p131
        %p334 = pneg %p128
        %p335 = pneg %p152
        %p336 = pneg %p149
        %p337 = pneg %p173
        %p338 = pneg %p170
        %p339 = pneg %p199
        %p340 = pneg %p196
        %s341 = sand.u32 %s186, 1
        %s342 = scalar_lea.sflag [#allocation4], %s341
        %s343 = sand.u32 %s186, 1
        %s344 = smul.addr %s343, 8
        %s345 = scalar_lea.vmem [#allocation10], %s344
        %v346 = vld [vmem:[%s299] sm:$0xff]
        %v347 = vld [vmem:[#allocation5] sm:$0xff]
        %v348 = vld [vmem:[#allocation5 + $0x8] sm:$0xff]
        %v349 = vld [vmem:[#allocation5 + $0x10] sm:$0xff]
        %v350 = vld [vmem:[#allocation5 + $0x18] sm:$0xff]
        %v351 = vld [vmem:[#allocation5 + $0x20] sm:$0xff]
        %v352 = vld [vmem:[#allocation5 + $0x28] sm:$0xff]
        %v353 = vld [vmem:[#allocation5 + $0x30] sm:$0xff]
        %v354 = vld [vmem:[#allocation5 + $0x38] sm:$0xff]
        %v355 = vld [vmem:[#allocation5 + $0x40] sm:$0xff]
        %v356 = vld [vmem:[#allocation5 + $0x48] sm:$0xff]
        %v357 = vld [vmem:[#allocation5 + $0x50] sm:$0xff]
        %v358 = vld [vmem:[#allocation5 + $0x58] sm:$0xff]
        %v359 = vld [vmem:[#allocation5 + $0x60] sm:$0xff]
        %v360 = vld [vmem:[#allocation5 + $0x68] sm:$0xff]
        %v361 = vld [vmem:[#allocation5 + $0x70] sm:$0xff]
        %v362 = vld [vmem:[#allocation5 + $0x78] sm:$0xff]
        %v363 = vld [vmem:[%s2] sm:$0x1]
        %v365 = vperm.slane %v363, 0
        %367 = vmatpush.msra.mxu0 %v362
        %368 = vmatpush.msra.mxu0 %v361
        %369 = vmatpush.msra.mxu0 %v360
        %370 = vmatpush.msra.mxu0 %v359
        %371 = vmatpush.msra.mxu0 %v358
        %372 = vmatpush.msra.mxu0 %v357
        %373 = vmatpush.msra.mxu0 %v356
        %374 = vmatpush.msra.mxu0 %v355
        %375 = vmatpush.msra.mxu0 %v354
        %376 = vmatpush.msra.mxu0 %v353
        %377 = vmatpush.msra.mxu0 %v352
        %378 = vmatpush.msra.mxu0 %v351
        %379 = vmatpush.msra.mxu0 %v350
        %380 = vmatpush.msra.mxu0 %v349
        %381 = vmatpush.msra.mxu0 %v348
        %382 = vmatpush.msra.mxu0 %v347
        %383 = vmatmul.f32.gmra.mxu0 %v346
        %v384 = vpop.f32.mrf.mxu0
        %v385 = vadd.f32 %v365, %v384
        %386 = vdwg.mxu0
        %vm387 = vcmp.gt.f32.partialorder %v385, 0.0
        %v388 = vmul.f32 %v385, 1.442695
        %v389 = vpow.pop %v388
        %v390 = vsub.f32 %v389, 1.0
        %v391 = vmul.f32 %v390, 1.6732632
        %v392 = vsel %vm387, %v385, %v391
        %v393 = vmul.f32 %v392, 1.050701
        %v394 = vld [vmem:[#allocation7] sm:$0xff]
        %v395 = vld [vmem:[#allocation7 + $0x8] sm:$0xff]
        %v396 = vld [vmem:[#allocation7 + $0x10] sm:$0xff]
        %v397 = vld [vmem:[#allocation7 + $0x18] sm:$0xff]
        %v398 = vld [vmem:[#allocation7 + $0x20] sm:$0xff]
        %v399 = vld [vmem:[#allocation7 + $0x28] sm:$0xff]
        %v400 = vld [vmem:[#allocation7 + $0x30] sm:$0xff]
        %v401 = vld [vmem:[#allocation7 + $0x38] sm:$0xff]
        %v402 = vld [vmem:[#allocation7 + $0x40] sm:$0xff]
        %v403 = vld [vmem:[#allocation7 + $0x48] sm:$0xff]
        %v404 = vld [vmem:[#allocation7 + $0x50] sm:$0xff]
        %v405 = vld [vmem:[#allocation7 + $0x58] sm:$0xff]
        %v406 = vld [vmem:[#allocation7 + $0x60] sm:$0xff]
        %v407 = vld [vmem:[#allocation7 + $0x68] sm:$0xff]
        %v408 = vld [vmem:[#allocation7 + $0x70] sm:$0xff]
        %v409 = vld [vmem:[#allocation7 + $0x78] sm:$0xff]
        %v410 = vld [vmem:[%s4] sm:$0x1]
        %v412 = vperm.slane %v410, 0
        %414 = vmatpush.msra.mxu0 %v409
        %415 = vmatpush.msra.mxu0 %v408
        %416 = vmatpush.msra.mxu0 %v407
        %417 = vmatpush.msra.mxu0 %v406
        %418 = vmatpush.msra.mxu0 %v405
        %419 = vmatpush.msra.mxu0 %v404
        %420 = vmatpush.msra.mxu0 %v403
        %421 = vmatpush.msra.mxu0 %v402
        %422 = vmatpush.msra.mxu0 %v401
        %423 = vmatpush.msra.mxu0 %v400
        %424 = vmatpush.msra.mxu0 %v399
        %425 = vmatpush.msra.mxu0 %v398
        %426 = vmatpush.msra.mxu0 %v397
        %427 = vmatpush.msra.mxu0 %v396
        %428 = vmatpush.msra.mxu0 %v395
        %429 = vmatpush.msra.mxu0 %v394
        %430 = vmatmul.f32.gmra.mxu0 %v393
        %v431 = vpop.f32.mrf.mxu0
        %v432 = vadd.f32 %v412, %v431
        %433 = vdwg.mxu0
        %vm434 = vcmp.gt.f32.partialorder %v432, 0.0
        %v435 = vmul.f32 %v432, 1.442695
        %v436 = vpow.pop %v435
        %v437 = vsub.f32 %v436, 1.0
        %v438 = vmul.f32 %v437, 1.6732632
        %v439 = vsel %vm434, %v432, %v438
        %v440 = vmul.f32 %v439, 1.050701
        %v441 = vld [vmem:[#allocation8] sm:$0xff]
        %v442 = vld [vmem:[#allocation8 + $0x8] sm:$0xff]
        %v443 = vld [vmem:[#allocation8 + $0x10] sm:$0xff]
        %v444 = vld [vmem:[#allocation8 + $0x18] sm:$0xff]
        %v445 = vld [vmem:[#allocation8 + $0x20] sm:$0xff]
        %v446 = vld [vmem:[#allocation8 + $0x28] sm:$0xff]
        %v447 = vld [vmem:[#allocation8 + $0x30] sm:$0xff]
        %v448 = vld [vmem:[#allocation8 + $0x38] sm:$0xff]
        %v449 = vld [vmem:[#allocation8 + $0x40] sm:$0xff]
        %v450 = vld [vmem:[#allocation8 + $0x48] sm:$0xff]
        %v451 = vld [vmem:[#allocation8 + $0x50] sm:$0xff]
        %v452 = vld [vmem:[#allocation8 + $0x58] sm:$0xff]
        %v453 = vld [vmem:[#allocation8 + $0x60] sm:$0xff]
        %v454 = vld [vmem:[#allocation8 + $0x68] sm:$0xff]
        %v455 = vld [vmem:[#allocation8 + $0x70] sm:$0xff]
        %v456 = vld [vmem:[#allocation8 + $0x78] sm:$0xff]
        %v457 = vld [vmem:[%s6] sm:$0x1]
        %v459 = vperm.slane %v457, 0
        %461 = vmatpush.msra.mxu0 %v456
        %462 = vmatpush.msra.mxu0 %v455
        %463 = vmatpush.msra.mxu0 %v454
        %464 = vmatpush.msra.mxu0 %v453
        %465 = vmatpush.msra.mxu0 %v452
        %466 = vmatpush.msra.mxu0 %v451
        %467 = vmatpush.msra.mxu0 %v450
        %468 = vmatpush.msra.mxu0 %v449
        %469 = vmatpush.msra.mxu0 %v448
        %470 = vmatpush.msra.mxu0 %v447
        %471 = vmatpush.msra.mxu0 %v446
        %472 = vmatpush.msra.mxu0 %v445
        %473 = vmatpush.msra.mxu0 %v444
        %474 = vmatpush.msra.mxu0 %v443
        %475 = vmatpush.msra.mxu0 %v442
        %476 = vmatpush.msra.mxu0 %v441
        %477 = vmatmul.f32.gmra.mxu0 %v440
        %v478 = vpop.f32.mrf.mxu0
        %v479 = vadd.f32 %v459, %v478
        %480 = vdwg.mxu0
        %481 = vst [vmem:[%s345] sm:$0xff] %v479
        %s482 = sand.u32 %s186, 1
        %s483 = scalar_lea.sflag [#allocation4], %s482
        %s484 = sand.u32 %s186, 1
        %s485 = smul.addr %s484, 8
        %s486 = scalar_lea.vmem [#allocation10], %s485
        // Predicated region
        $region65: #{tpu_custom_call.1} parent=47 // pred_check
          %p487 = pneg %p196
        $region66: #{tpu_custom_call.1} parent=47 // pred_check_branch
          %489 = sbr.rel (%p487) target = $region68
        $region67: #{tpu_custom_call.1} parent=47 // pred_region
          %491 = vsyncadd %s483, 0
          %s492 = smul.addr %s26, 8
          %s493 = scalar_lea.hbm %s7, %s492
          %s495 = sshll.u32 %s486, 4
          %s496 = int_to_ptr.vmem [resolvable:$true] %s495
          %s497 = sshll.u32 %s493, 4
          %s498 = int_to_ptr.hbm [resolvable:$true] %s497
          %500 = dma.vmem_to_hbm [thread:$0]  %s496, 128, %s498, %s483
        $region68: #{tpu_custom_call.1} parent=47 // pred_fallthru
          _
      $region48: #{tpu_custom_call.1} parent=5 // pred_fallthru
        _
      %p501 = scmp.le.s32.totalorder 2, %s21
      // Predicated region
      $region69: #{tpu_custom_call.1} parent=5 // pred_check
        %p502 = pneg %p501
      $region70: #{tpu_custom_call.1} parent=5 // pred_check_branch
        %504 = sbr.rel (%p502) target = $region72
      $region71: #{tpu_custom_call.1} parent=5 // pred_region
        %s505 = ssub.s32 %s21, 2
        // Predicated region
        $region73: #{tpu_custom_call.1} parent=71 // pred_check
          %p506 = pneg %p202
        $region74: #{tpu_custom_call.1} parent=71 // pred_check_branch
          %508 = sbr.rel (%p506) target = $region76
        $region75: #{tpu_custom_call.1} parent=71 // pred_region
          %s509 = sand.u32 %s187, 1
          %s510 = scalar_lea.sflag [#allocation4], %s509
          %s511 = sand.u32 %s187, 1
          %s512 = smul.addr %s511, 8
          %s513 = scalar_lea.vmem [#allocation10], %s512
          %515 = dma.done %s510, 128
        $region76: #{tpu_custom_call.1} parent=71 // pred_fallthru
          _
      $region72: #{tpu_custom_call.1} parent=5 // pred_fallthru
        _
    $region6: #{tpu_custom_call.1} parent=1 // loop_footer
      %s25 = sadd.s32 1, %s21
    $region7: #{tpu_custom_call.1} parent=1 // loop_footer_branch
      %20 = sbr.rel target = $region3
    $region8: #{tpu_custom_call.1} parent=1 // loop_exit
      _
    %516 = vsyncpa [#allocation3], 1
    %s517 = scalar_lea.sflag [#allocation3], 1
    %518 = vsyncpa %s517, 1
    %519 = vsyncpa [#allocation6], 1
    %520 = vsyncpa [#allocation9], 1
    %521 = vsyncpa [#allocation4], 1
    %s522 = scalar_lea.sflag [#allocation4], 1
    %523 = vsyncpa %s522, 1

// kernel: tpu_custom_call.1
$region0: #{tpu_custom_call.1}
  #allocation0 [shape = 'u32[]', space=smem, size = 0x4, offset = 0x4, fixed_abs, tag = 'smem constant byte address 0x4 - core index']
  #allocation1 [shape = 'u32[72,128]{1,0:T(1,128)}', space=vmem, size = 0x9000, scoped, tag = 'internal scratch']
  %s0 = inlined_call_operand.hbm [shape: f32[16,128], index: 0, kind: input, shape index: {}]
  %s1 = inlined_call_operand.hbm [shape: f32[128,128], index: 1, kind: input, shape index: {}]
  %s2 = inlined_call_operand.vmem [shape: f32[1,128], index: 2, kind: input, shape index: {}]
  %s3 = inlined_call_operand.hbm [shape: f32[128,128], index: 3, kind: input, shape index: {}]
  %s4 = inlined_call_operand.vmem [shape: f32[1,128], index: 4, kind: input, shape index: {}]
  %s5 = inlined_call_operand.hbm [shape: f32[128,128], index: 5, kind: input, shape index: {}]
  %s6 = inlined_call_operand.vmem [shape: f32[1,128], index: 6, kind: input, shape index: {}]
  %s7 = inlined_call_operand.hbm [shape: f32[16,128], index: 7, kind: output, shape index: {}]
  %s8 = sld [smem:[#allocation0]]
  $region77: #{tpu_custom_call.1} parent=0
    _
  %s10 = ssub.s32 1, %s8
  %s11 = scalar_select 0, %s10, %s8
  $region1: #{tpu_custom_call.1} parent=0
    #allocation2 [shape = 'u8[8192]{0}', space=vmem, size = 0x2000, scoped, tag = 'input window, operand 0']
    #allocation3 [shape = 's32[2]{0}', space=sflag, size = 0x8, scoped, tag = 'scoped memory for tpu_custom_call.1']
    #allocation4 [shape = 's32[2]{0}', space=sflag, size = 0x8, scoped, tag = 'scoped memory for tpu_custom_call.1']
    #allocation5 [shape = 'u8[65536]{0}', space=vmem, size = 0x10000, scoped, tag = 'input window, operand 1, single buffered']
    #allocation6 [shape = 's32[1]{0}', space=sflag, size = 0x4, scoped, tag = 'scoped memory for tpu_custom_call.1']
    #allocation7 [shape = 'u8[65536]{0}', space=vmem, size = 0x10000, scoped, tag = 'input window, operand 3, single buffered']
    #allocation8 [shape = 'u8[65536]{0}', space=vmem, size = 0x10000, scoped, tag = 'input window, operand 5, single buffered']
    #allocation9 [shape = 's32[1]{0}', space=sflag, size = 0x4, scoped, tag = 'scoped memory for tpu_custom_call.1']
    #allocation10 [shape = 'u8[8192]{0}', space=vmem, size = 0x2000, scoped, tag = 'output window, operand 0']
    %12 = vsyncpa [#allocation3], 0
    %s13 = scalar_lea.sflag [#allocation3], 1
    %14 = vsyncpa %s13, 0
    %15 = vsyncpa [#allocation6], 0
    %16 = vsyncpa [#allocation9], 0
    %17 = vsyncpa [#allocation4], 0
    %s18 = scalar_lea.sflag [#allocation4], 1
    %19 = vsyncpa %s18, 0
    loop: start=0, step=1, limit=4
    $region2: #{tpu_custom_call.1} parent=1 // loop_pre_header
      _
    $region3: #{tpu_custom_call.1} parent=1 // loop_header
      %s21 = sphi 0, %s25
      %p22 = scmp.ge.s32.totalorder %s21, 4
      %s31 = sphi 0, %s33
      %s34 = sphi 0, %s31
      %s35 = sphi 0, %s34
      %s51 = sphi 0, %s35
      %s55 = sphi 0, %s55
      %s57 = sphi 0, %s55
      %s58 = sphi 0, %s57
      %s72 = sphi 0, %s58
      %s76 = sphi 0, %s76
      %s78 = sphi 0, %s76
      %s79 = sphi 0, %s78
      %s93 = sphi 0, %s79
      %s97 = sphi 0, %s97
      %s99 = sphi 0, %s97
      %s100 = sphi 0, %s99
      %s114 = sphi 0, %s100
      %s118 = sphi 0, %s118
      %s120 = sphi 0, %s118
      %s121 = sphi 0, %s120
      %s135 = sphi 0, %s121
      %s139 = sphi 0, %s139
      %s141 = sphi 0, %s139
      %s142 = sphi 0, %s141
      %s156 = sphi 0, %s142
      %s160 = sphi 0, %s160
      %s162 = sphi 0, %s160
      %s163 = sphi 0, %s162
      %s177 = sphi 0, %s163
      %s183 = sphi 0, %s185
      %s186 = sphi 0, %s183
      %s187 = sphi 0, %s186
      %s203 = sphi 0, %s187
    $region4: #{tpu_custom_call.1} parent=1 // loop_header_branch
      %24 = sbr.rel (%p22) target = $region8
    $region5: #{tpu_custom_call.1} parent=1 // loop_body
      %s26 = ssub.s32 %s21, 1
      %s27 = ssub.s32 %s21, 2
      %s28 = sadd.s32 %s21, 1
      %s29 = ssub.s32 %s21, %s28
      %p30 = scmp.eq.s32.totalorder %s29, 0
      %s32 = sadd.s32 %s31, 1
      %s33 = scalar_select %p30, %s31, %s32
      %p36 = pneg %p30
      %p37 = scmp.eq.s32.totalorder %s21, 1
      %p38 = por %p36, %p37
      %p39 = scmp.ne.s32.totalorder %s31, %s34
      %p40 = scmp.eq.s32.totalorder %s21, 0
      %p41 = por %p39, %p40
      %p42 = scmp.ne.s32.totalorder %s31, %s34
      %p43 = scmp.eq.s32.totalorder %s26, 1
      %p44 = por %p42, %p43
      %p45 = scmp.ne.s32.totalorder %s34, %s35
      %p46 = scmp.eq.s32.totalorder %s26, 0
      %p47 = por %p45, %p46
      %p48 = scmp.ne.s32.totalorder %s34, %s35
      %p49 = scmp.eq.s32.totalorder %s27, 1
      %p50 = por %p48, %p49
      %p52 = scmp.ne.s32.totalorder %s35, %s51
      %p53 = scmp.eq.s32.totalorder %s27, 0
      %p54 = por %p52, %p53
      %s56 = sadd.s32 %s55, 1
      %p59 = scmp.eq.s32.totalorder %s21, 1
      %p60 = scmp.ne.s32.totalorder %s55, %s57
      %p61 = scmp.eq.s32.totalorder %s21, 0
      %p62 = por %p60, %p61
      %p63 = scmp.ne.s32.totalorder %s55, %s57
      %p64 = scmp.eq.s32.totalorder %s26, 1
      %p65 = por %p63, %p64
      %p66 = scmp.ne.s32.totalorder %s57, %s58
      %p67 = scmp.eq.s32.totalorder %s26, 0
      %p68 = por %p66, %p67
      %p69 = scmp.ne.s32.totalorder %s57, %s58
      %p70 = scmp.eq.s32.totalorder %s27, 1
      %p71 = por %p69, %p70
      %p73 = scmp.ne.s32.totalorder %s58, %s72
      %p74 = scmp.eq.s32.totalorder %s27, 0
      %p75 = por %p73, %p74
      %s77 = sadd.s32 %s76, 1
      %p80 = scmp.eq.s32.totalorder %s21, 1
      %p81 = scmp.ne.s32.totalorder %s76, %s78
      %p82 = scmp.eq.s32.totalorder %s21, 0
      %p83 = por %p81, %p82
      %p84 = scmp.ne.s32.totalorder %s76, %s78
      %p85 = scmp.eq.s32.totalorder %s26, 1
      %p86 = por %p84, %p85
      %p87 = scmp.ne.s32.totalorder %s78, %s79
      %p88 = scmp.eq.s32.totalorder %s26, 0
      %p89 = por %p87, %p88
      %p90 = scmp.ne.s32.totalorder %s78, %s79
      %p91 = scmp.eq.s32.totalorder %s27, 1
      %p92 = por %p90, %p91
      %p94 = scmp.ne.s32.totalorder %s79, %s93
      %p95 = scmp.eq.s32.totalorder %s27, 0
      %p96 = por %p94, %p95
      %s98 = sadd.s32 %s97, 1
      %p101 = scmp.eq.s32.totalorder %s21, 1
      %p102 = scmp.ne.s32.totalorder %s97, %s99
      %p103 = scmp.eq.s32.totalorder %s21, 0
      %p104 = por %p102, %p103
      %p105 = scmp.ne.s32.totalorder %s97, %s99
      %p106 = scmp.eq.s32.totalorder %s26, 1
      %p107 = por %p105, %p106
      %p108 = scmp.ne.s32.totalorder %s99, %s100
      %p109 = scmp.eq.s32.totalorder %s26, 0
      %p110 = por %p108, %p109
      %p111 = scmp.ne.s32.totalorder %s99, %s100
      %p112 = scmp.eq.s32.totalorder %s27, 1
      %p113 = por %p111, %p112
      %p115 = scmp.ne.s32.totalorder %s100, %s114
      %p116 = scmp.eq.s32.totalorder %s27, 0
      %p117 = por %p115, %p116
      %s119 = sadd.s32 %s118, 1
      %p122 = scmp.eq.s32.totalorder %s21, 1
      %p123 = scmp.ne.s32.totalorder %s118, %s120
      %p124 = scmp.eq.s32.totalorder %s21, 0
      %p125 = por %p123, %p124
      %p126 = scmp.ne.s32.totalorder %s118, %s120
      %p127 = scmp.eq.s32.totalorder %s26, 1
      %p128 = por %p126, %p127
      %p129 = scmp.ne.s32.totalorder %s120, %s121
      %p130 = scmp.eq.s32.totalorder %s26, 0
      %p131 = por %p129, %p130
      %p132 = scmp.ne.s32.totalorder %s120, %s121
      %p133 = scmp.eq.s32.totalorder %s27, 1
      %p134 = por %p132, %p133
      %p136 = scmp.ne.s32.totalorder %s121, %s135
      %p137 = scmp.eq.s32.totalorder %s27, 0
      %p138 = por %p136, %p137
      %s140 = sadd.s32 %s139, 1
      %p143 = scmp.eq.s32.totalorder %s21, 1
      %p144 = scmp.ne.s32.totalorder %s139, %s141
      %p145 = scmp.eq.s32.totalorder %s21, 0
      %p146 = por %p144, %p145
      %p147 = scmp.ne.s32.totalorder %s139, %s141
      %p148 = scmp.eq.s32.totalorder %s26, 1
      %p149 = por %p147, %p148
      %p150 = scmp.ne.s32.totalorder %s141, %s142
      %p151 = scmp.eq.s32.totalorder %s26, 0
      %p152 = por %p150, %p151
      %p153 = scmp.ne.s32.totalorder %s141, %s142
      %p154 = scmp.eq.s32.totalorder %s27, 1
      %p155 = por %p153, %p154
      %p157 = scmp.ne.s32.totalorder %s142, %s156
      %p158 = scmp.eq.s32.totalorder %s27, 0
      %p159 = por %p157, %p158
      %s161 = sadd.s32 %s160, 1
      %p164 = scmp.eq.s32.totalorder %s21, 1
      %p165 = scmp.ne.s32.totalorder %s160, %s162
      %p166 = scmp.eq.s32.totalorder %s21, 0
      %p167 = por %p165, %p166
      %p168 = scmp.ne.s32.totalorder %s160, %s162
      %p169 = scmp.eq.s32.totalorder %s26, 1
      %p170 = por %p168, %p169
      %p171 = scmp.ne.s32.totalorder %s162, %s163
      %p172 = scmp.eq.s32.totalorder %s26, 0
      %p173 = por %p171, %p172
      %p174 = scmp.ne.s32.totalorder %s162, %s163
      %p175 = scmp.eq.s32.totalorder %s27, 1
      %p176 = por %p174, %p175
      %p178 = scmp.ne.s32.totalorder %s163, %s177
      %p179 = scmp.eq.s32.totalorder %s27, 0
      %p180 = por %p178, %p179
      %s181 = ssub.s32 %s21, %s28
      %p182 = scmp.eq.s32.totalorder %s181, 0
      %s184 = sadd.s32 %s183, 1
      %s185 = scalar_select %p182, %s183, %s184
      %p188 = pneg %p182
      %p189 = scmp.eq.s32.totalorder %s21, 1
      %p190 = por %p188, %p189
      %p191 = scmp.ne.s32.totalorder %s183, %s186
      %p192 = scmp.eq.s32.totalorder %s21, 0
      %p193 = por %p191, %p192
      %p194 = scmp.ne.s32.totalorder %s183, %s186
      %p195 = scmp.eq.s32.totalorder %s26, 1
      %p196 = por %p194, %p195
      %p197 = scmp.ne.s32.totalorder %s186, %s187
      %p198 = scmp.eq.s32.totalorder %s26, 0
      %p199 = por %p197, %p198
      %p200 = scmp.ne.s32.totalorder %s186, %s187
      %p201 = scmp.eq.s32.totalorder %s27, 1
      %p202 = por %p200, %p201
      %p204 = scmp.ne.s32.totalorder %s187, %s203
      %p205 = scmp.eq.s32.totalorder %s27, 0
      %p206 = por %p204, %p205
      %p207 = scmp.le.s32.totalorder 1, %s21
      %p208 = scmp.lt.s32.totalorder %s21, 3
      %p209 = pnand %p207, %p208
      %p210 = pneg %p209
      // Predicated region
      $region9: #{tpu_custom_call.1} parent=5 // pred_check
        _
      $region10: #{tpu_custom_call.1} parent=5 // pred_check_branch
        %212 = sbr.rel (%p209) target = $region12
      $region11: #{tpu_custom_call.1} parent=5 // pred_region
        %s213 = ssub.s32 %s21, 1
        // Predicated region
        $region13: #{tpu_custom_call.1} parent=11 // pred_check
          %p214 = pneg %p68
        $region14: #{tpu_custom_call.1} parent=11 // pred_check_branch
          %216 = sbr.rel (%p214) target = $region16
        $region15: #{tpu_custom_call.1} parent=11 // pred_region
          %218 = vsyncadd [#allocation6], 0
          %s219 = sshll.u32 %s1, 4
          %s220 = int_to_ptr.hbm [resolvable:$true] %s219
          %s221 = sshll.u32 [#allocation5], 4
          %s222 = int_to_ptr.vmem [resolvable:$true] %s221
          %227 = dma.hbm_to_vmem [thread:$0]  %s220, 2048, %s222, [#allocation6], 128, 128, 8
        $region16: #{tpu_custom_call.1} parent=11 // pred_fallthru
          _
        // Predicated region
        $region17: #{tpu_custom_call.1} parent=11 // pred_check
          %p228 = pneg %p89
        $region18: #{tpu_custom_call.1} parent=11 // pred_check_branch
          %230 = sbr.rel (%p228) target = $region20
        $region19: #{tpu_custom_call.1} parent=11 // pred_region
          _
        $region20: #{tpu_custom_call.1} parent=11 // pred_fallthru
          _
        // Predicated region
        $region21: #{tpu_custom_call.1} parent=11 // pred_check
          %p231 = pneg %p110
        $region22: #{tpu_custom_call.1} parent=11 // pred_check_branch
          %233 = sbr.rel (%p231) target = $region24
        $region23: #{tpu_custom_call.1} parent=11 // pred_region
          %235 = vsyncadd [#allocation6], 0
          %s236 = sshll.u32 %s3, 4
          %s237 = int_to_ptr.hbm [resolvable:$true] %s236
          %s238 = sshll.u32 [#allocation7], 4
          %s239 = int_to_ptr.vmem [resolvable:$true] %s238
          %244 = dma.hbm_to_vmem [thread:$0]  %s237, 2048, %s239, [#allocation6], 128, 128, 8
        $region24: #{tpu_custom_call.1} parent=11 // pred_fallthru
          _
        // Predicated region
        $region25: #{tpu_custom_call.1} parent=11 // pred_check
          %p245 = pneg %p131
        $region26: #{tpu_custom_call.1} parent=11 // pred_check_branch
          %247 = sbr.rel (%p245) target = $region28
        $region27: #{tpu_custom_call.1} parent=11 // pred_region
          _
        $region28: #{tpu_custom_call.1} parent=11 // pred_fallthru
          _
        // Predicated region
        $region29: #{tpu_custom_call.1} parent=11 // pred_check
          %p248 = pneg %p152
        $region30: #{tpu_custom_call.1} parent=11 // pred_check_branch
          %250 = sbr.rel (%p248) target = $region32
        $region31: #{tpu_custom_call.1} parent=11 // pred_region
          %252 = vsyncadd [#allocation9], 0
          %s253 = sshll.u32 %s5, 4
          %s254 = int_to_ptr.hbm [resolvable:$true] %s253
          %s255 = sshll.u32 [#allocation8], 4
          %s256 = int_to_ptr.vmem [resolvable:$true] %s255
          %261 = dma.hbm_to_vmem [thread:$0]  %s254, 2048, %s256, [#allocation9], 128, 128, 8
        $region32: #{tpu_custom_call.1} parent=11 // pred_fallthru
          _
        // Predicated region
        $region33: #{tpu_custom_call.1} parent=11 // pred_check
          %p262 = pneg %p173
        $region34: #{tpu_custom_call.1} parent=11 // pred_check_branch
          %264 = sbr.rel (%p262) target = $region36
        $region35: #{tpu_custom_call.1} parent=11 // pred_region
          _
        $region36: #{tpu_custom_call.1} parent=11 // pred_fallthru
          _
      $region12: #{tpu_custom_call.1} parent=5 // pred_fallthru
        _
      %p265 = scmp.lt.s32.totalorder %s21, 2
      // Predicated region
      $region37: #{tpu_custom_call.1} parent=5 // pred_check
        %p266 = pneg %p265
      $region38: #{tpu_custom_call.1} parent=5 // pred_check_branch
        %268 = sbr.rel (%p266) target = $region40
      $region39: #{tpu_custom_call.1} parent=5 // pred_region
        // Predicated region
        $region41: #{tpu_custom_call.1} parent=39 // pred_check
          %p269 = pneg %p41
        $region42: #{tpu_custom_call.1} parent=39 // pred_check_branch
          %271 = sbr.rel (%p269) target = $region44
        $region43: #{tpu_custom_call.1} parent=39 // pred_region
          %s272 = sand.u32 %s31, 1
          %s273 = scalar_lea.sflag [#allocation3], %s272
          %s274 = sand.u32 %s31, 1
          %s275 = smul.addr %s274, 8
          %s276 = scalar_lea.vmem [#allocation2], %s275
          %278 = vsyncadd %s273, 0
          %s279 = smul.addr %s21, 8
          %s280 = scalar_lea.hbm %s0, %s279
          %s282 = sshll.u32 %s280, 4
          %s283 = int_to_ptr.hbm [resolvable:$true] %s282
          %s284 = sshll.u32 %s276, 4
          %s285 = int_to_ptr.vmem [resolvable:$true] %s284
          %287 = dma.hbm_to_vmem [thread:$0]  %s283, 128, %s285, %s273
        $region44: #{tpu_custom_call.1} parent=39 // pred_fallthru
          _
      $region40: #{tpu_custom_call.1} parent=5 // pred_fallthru
        _
      %p288 = scmp.le.s32.totalorder 1, %s21
      %p289 = scmp.lt.s32.totalorder %s21, 3
      %p290 = pnand %p288, %p289
      %p291 = pneg %p290
      // Predicated region
      $region45: #{tpu_custom_call.1} parent=5 // pred_check
        _
      $region46: #{tpu_custom_call.1} parent=5 // pred_check_branch
        %293 = sbr.rel (%p290) target = $region48
      $region47: #{tpu_custom_call.1} parent=5 // pred_region
        %s294 = ssub.s32 %s21, 1
        %s295 = sand.u32 %s34, 1
        %s296 = scalar_lea.sflag [#allocation3], %s295
        %s297 = sand.u32 %s34, 1
        %s298 = smul.addr %s297, 8
        %s299 = scalar_lea.vmem [#allocation2], %s298
        // Predicated region
        $region49: #{tpu_custom_call.1} parent=47 // pred_check
          %p300 = pneg %p47
        $region50: #{tpu_custom_call.1} parent=47 // pred_check_branch
          %302 = sbr.rel (%p300) target = $region52
        $region51: #{tpu_custom_call.1} parent=47 // pred_region
          %304 = dma.done %s296, 128
        $region52: #{tpu_custom_call.1} parent=47 // pred_fallthru
          _
        // Predicated region
        $region53: #{tpu_custom_call.1} parent=47 // pred_check
          %p305 = pneg %p68
        $region54: #{tpu_custom_call.1} parent=47 // pred_check_branch
          %307 = sbr.rel (%p305) target = $region56
        $region55: #{tpu_custom_call.1} parent=47 // pred_region
          %309 = dma.done [#allocation6], 2048
        $region56: #{tpu_custom_call.1} parent=47 // pred_fallthru
          _
        // Predicated region
        $region57: #{tpu_custom_call.1} parent=47 // pred_check
          %p310 = pneg %p110
        $region58: #{tpu_custom_call.1} parent=47 // pred_check_branch
          %312 = sbr.rel (%p310) target = $region60
        $region59: #{tpu_custom_call.1} parent=47 // pred_region
          %314 = dma.done [#allocation6], 2048
        $region60: #{tpu_custom_call.1} parent=47 // pred_fallthru
          _
        // Predicated region
        $region61: #{tpu_custom_call.1} parent=47 // pred_check
          %p315 = pneg %p152
        $region62: #{tpu_custom_call.1} parent=47 // pred_check_branch
          %317 = sbr.rel (%p315) target = $region64
        $region63: #{tpu_custom_call.1} parent=47 // pred_region
          %319 = dma.done [#allocation9], 2048
        $region64: #{tpu_custom_call.1} parent=47 // pred_fallthru
          _
        %s320 = sand.u32 %s34, 1
        %s321 = scalar_lea.sflag [#allocation3], %s320
        %s322 = sand.u32 %s34, 1
        %s323 = smul.addr %s322, 8
        %s324 = scalar_lea.vmem [#allocation2], %s323
        %p325 = pneg %p47
        %p326 = pneg %p44
        %p327 = pneg %p68
        %p328 = pneg %p65
        %p329 = pneg %p89
        %p330 = pneg %p86
        %p331 = pneg %p110
        %p332 = pneg %p107
        %p333 = pneg %p131
        %p334 = pneg %p128
        %p335 = pneg %p152
        %p336 = pneg %p149
        %p337 = pneg %p173
        %p338 = pneg %p170
        %p339 = pneg %p199
        %p340 = pneg %p196
        %s341 = sand.u32 %s186, 1
        %s342 = scalar_lea.sflag [#allocation4], %s341
        %s343 = sand.u32 %s186, 1
        %s344 = smul.addr %s343, 8
        %s345 = scalar_lea.vmem [#allocation10], %s344
        %v346 = vld [vmem:[%s299] sm:$0xff]
        %v347 = vld [vmem:[#allocation5] sm:$0xff]
        %v348 = vld [vmem:[#allocation5 + $0x8] sm:$0xff]
        %v349 = vld [vmem:[#allocation5 + $0x10] sm:$0xff]
        %v350 = vld [vmem:[#allocation5 + $0x18] sm:$0xff]
        %v351 = vld [vmem:[#allocation5 + $0x20] sm:$0xff]
        %v352 = vld [vmem:[#allocation5 + $0x28] sm:$0xff]
        %v353 = vld [vmem:[#allocation5 + $0x30] sm:$0xff]
        %v354 = vld [vmem:[#allocation5 + $0x38] sm:$0xff]
        %v355 = vld [vmem:[#allocation5 + $0x40] sm:$0xff]
        %v356 = vld [vmem:[#allocation5 + $0x48] sm:$0xff]
        %v357 = vld [vmem:[#allocation5 + $0x50] sm:$0xff]
        %v358 = vld [vmem:[#allocation5 + $0x58] sm:$0xff]
        %v359 = vld [vmem:[#allocation5 + $0x60] sm:$0xff]
        %v360 = vld [vmem:[#allocation5 + $0x68] sm:$0xff]
        %v361 = vld [vmem:[#allocation5 + $0x70] sm:$0xff]
        %v362 = vld [vmem:[#allocation5 + $0x78] sm:$0xff]
        %v363 = vld [vmem:[%s2] sm:$0x1]
        %v365 = vperm.slane %v363, 0
        %367 = vmatpush.msra.mxu0 %v362
        %368 = vmatpush.msra.mxu0 %v361
        %369 = vmatpush.msra.mxu0 %v360
        %370 = vmatpush.msra.mxu0 %v359
        %371 = vmatpush.msra.mxu0 %v358
        %372 = vmatpush.msra.mxu0 %v357
        %373 = vmatpush.msra.mxu0 %v356
        %374 = vmatpush.msra.mxu0 %v355
        %375 = vmatpush.msra.mxu0 %v354
        %376 = vmatpush.msra.mxu0 %v353
        %377 = vmatpush.msra.mxu0 %v352
        %378 = vmatpush.msra.mxu0 %v351
        %379 = vmatpush.msra.mxu0 %v350
        %380 = vmatpush.msra.mxu0 %v349
        %381 = vmatpush.msra.mxu0 %v348
        %382 = vmatpush.msra.mxu0 %v347
        %383 = vmatmul.f32.gmra.mxu0 %v346
        %v384 = vpop.f32.mrf.mxu0
        %v385 = vadd.f32 %v365, %v384
        %386 = vdwg.mxu0
        %vm387 = vcmp.gt.f32.partialorder %v385, 0.0
        %v388 = vmul.f32 %v385, 1.442695
        %v389 = vpow.pop %v388
        %v390 = vsub.f32 %v389, 1.0
        %v391 = vmul.f32 %v390, 1.6732632
        %v392 = vsel %vm387, %v385, %v391
        %v393 = vmul.f32 %v392, 1.050701
        %v394 = vld [vmem:[#allocation7] sm:$0xff]
        %v395 = vld [vmem:[#allocation7 + $0x8] sm:$0xff]
        %v396 = vld [vmem:[#allocation7 + $0x10] sm:$0xff]
        %v397 = vld [vmem:[#allocation7 + $0x18] sm:$0xff]
        %v398 = vld [vmem:[#allocation7 + $0x20] sm:$0xff]
        %v399 = vld [vmem:[#allocation7 + $0x28] sm:$0xff]
        %v400 = vld [vmem:[#allocation7 + $0x30] sm:$0xff]
        %v401 = vld [vmem:[#allocation7 + $0x38] sm:$0xff]
        %v402 = vld [vmem:[#allocation7 + $0x40] sm:$0xff]
        %v403 = vld [vmem:[#allocation7 + $0x48] sm:$0xff]
        %v404 = vld [vmem:[#allocation7 + $0x50] sm:$0xff]
        %v405 = vld [vmem:[#allocation7 + $0x58] sm:$0xff]
        %v406 = vld [vmem:[#allocation7 + $0x60] sm:$0xff]
        %v407 = vld [vmem:[#allocation7 + $0x68] sm:$0xff]
        %v408 = vld [vmem:[#allocation7 + $0x70] sm:$0xff]
        %v409 = vld [vmem:[#allocation7 + $0x78] sm:$0xff]
        %v410 = vld [vmem:[%s4] sm:$0x1]
        %v412 = vperm.slane %v410, 0
        %414 = vmatpush.msra.mxu0 %v409
        %415 = vmatpush.msra.mxu0 %v408
        %416 = vmatpush.msra.mxu0 %v407
        %417 = vmatpush.msra.mxu0 %v406
        %418 = vmatpush.msra.mxu0 %v405
        %419 = vmatpush.msra.mxu0 %v404
        %420 = vmatpush.msra.mxu0 %v403
        %421 = vmatpush.msra.mxu0 %v402
        %422 = vmatpush.msra.mxu0 %v401
        %423 = vmatpush.msra.mxu0 %v400
        %424 = vmatpush.msra.mxu0 %v399
        %425 = vmatpush.msra.mxu0 %v398
        %426 = vmatpush.msra.mxu0 %v397
        %427 = vmatpush.msra.mxu0 %v396
        %428 = vmatpush.msra.mxu0 %v395
        %429 = vmatpush.msra.mxu0 %v394
        %430 = vmatmul.f32.gmra.mxu0 %v393
        %v431 = vpop.f32.mrf.mxu0
        %v432 = vadd.f32 %v412, %v431
        %433 = vdwg.mxu0
        %vm434 = vcmp.gt.f32.partialorder %v432, 0.0
        %v435 = vmul.f32 %v432, 1.442695
        %v436 = vpow.pop %v435
        %v437 = vsub.f32 %v436, 1.0
        %v438 = vmul.f32 %v437, 1.6732632
        %v439 = vsel %vm434, %v432, %v438
        %v440 = vmul.f32 %v439, 1.050701
        %v441 = vld [vmem:[#allocation8] sm:$0xff]
        %v442 = vld [vmem:[#allocation8 + $0x8] sm:$0xff]
        %v443 = vld [vmem:[#allocation8 + $0x10] sm:$0xff]
        %v444 = vld [vmem:[#allocation8 + $0x18] sm:$0xff]
        %v445 = vld [vmem:[#allocation8 + $0x20] sm:$0xff]
        %v446 = vld [vmem:[#allocation8 + $0x28] sm:$0xff]
        %v447 = vld [vmem:[#allocation8 + $0x30] sm:$0xff]
        %v448 = vld [vmem:[#allocation8 + $0x38] sm:$0xff]
        %v449 = vld [vmem:[#allocation8 + $0x40] sm:$0xff]
        %v450 = vld [vmem:[#allocation8 + $0x48] sm:$0xff]
        %v451 = vld [vmem:[#allocation8 + $0x50] sm:$0xff]
        %v452 = vld [vmem:[#allocation8 + $0x58] sm:$0xff]
        %v453 = vld [vmem:[#allocation8 + $0x60] sm:$0xff]
        %v454 = vld [vmem:[#allocation8 + $0x68] sm:$0xff]
        %v455 = vld [vmem:[#allocation8 + $0x70] sm:$0xff]
        %v456 = vld [vmem:[#allocation8 + $0x78] sm:$0xff]
        %v457 = vld [vmem:[%s6] sm:$0x1]
        %v459 = vperm.slane %v457, 0
        %461 = vmatpush.msra.mxu0 %v456
        %462 = vmatpush.msra.mxu0 %v455
        %463 = vmatpush.msra.mxu0 %v454
        %464 = vmatpush.msra.mxu0 %v453
        %465 = vmatpush.msra.mxu0 %v452
        %466 = vmatpush.msra.mxu0 %v451
        %467 = vmatpush.msra.mxu0 %v450
        %468 = vmatpush.msra.mxu0 %v449
        %469 = vmatpush.msra.mxu0 %v448
        %470 = vmatpush.msra.mxu0 %v447
        %471 = vmatpush.msra.mxu0 %v446
        %472 = vmatpush.msra.mxu0 %v445
        %473 = vmatpush.msra.mxu0 %v444
        %474 = vmatpush.msra.mxu0 %v443
        %475 = vmatpush.msra.mxu0 %v442
        %476 = vmatpush.msra.mxu0 %v441
        %477 = vmatmul.f32.gmra.mxu0 %v440
        %v478 = vpop.f32.mrf.mxu0
        %v479 = vadd.f32 %v459, %v478
        %480 = vdwg.mxu0
        %481 = vst [vmem:[%s345] sm:$0xff] %v479
        %s482 = sand.u32 %s186, 1
        %s483 = scalar_lea.sflag [#allocation4], %s482
        %s484 = sand.u32 %s186, 1
        %s485 = smul.addr %s484, 8
        %s486 = scalar_lea.vmem [#allocation10], %s485
        // Predicated region
        $region65: #{tpu_custom_call.1} parent=47 // pred_check
          %p487 = pneg %p196
        $region66: #{tpu_custom_call.1} parent=47 // pred_check_branch
          %489 = sbr.rel (%p487) target = $region68
        $region67: #{tpu_custom_call.1} parent=47 // pred_region
          %491 = vsyncadd %s483, 0
          %s492 = smul.addr %s26, 8
          %s493 = scalar_lea.hbm %s7, %s492
          %s495 = sshll.u32 %s486, 4
          %s496 = int_to_ptr.vmem [resolvable:$true] %s495
          %s497 = sshll.u32 %s493, 4
          %s498 = int_to_ptr.hbm [resolvable:$true] %s497
          %500 = dma.vmem_to_hbm [thread:$0]  %s496, 128, %s498, %s483
        $region68: #{tpu_custom_call.1} parent=47 // pred_fallthru
          _
      $region48: #{tpu_custom_call.1} parent=5 // pred_fallthru
        _
      %p501 = scmp.le.s32.totalorder 2, %s21
      // Predicated region
      $region69: #{tpu_custom_call.1} parent=5 // pred_check
        %p502 = pneg %p501
      $region70: #{tpu_custom_call.1} parent=5 // pred_check_branch
        %504 = sbr.rel (%p502) target = $region72
      $region71: #{tpu_custom_call.1} parent=5 // pred_region
        %s505 = ssub.s32 %s21, 2
        // Predicated region
        $region73: #{tpu_custom_call.1} parent=71 // pred_check
          %p506 = pneg %p202
        $region74: #{tpu_custom_call.1} parent=71 // pred_check_branch
          %508 = sbr.rel (%p506) target = $region76
        $region75: #{tpu_custom_call.1} parent=71 // pred_region
          %s509 = sand.u32 %s187, 1
          %s510 = scalar_lea.sflag [#allocation4], %s509
          %s511 = sand.u32 %s187, 1
          %s512 = smul.addr %s511, 8
          %s513 = scalar_lea.vmem [#allocation10], %s512
          %515 = dma.done %s510, 128
        $region76: #{tpu_custom_call.1} parent=71 // pred_fallthru
          _
      $region72: #{tpu_custom_call.1} parent=5 // pred_fallthru
        _
    $region6: #{tpu_custom_call.1} parent=1 // loop_footer
      %s25 = sadd.s32 1, %s21
    $region7: #{tpu_custom_call.1} parent=1 // loop_footer_branch
      %20 = sbr.rel target = $region3
    $region8: #{tpu_custom_call.1} parent=1 // loop_exit
      _
    %516 = vsyncpa [#allocation3], 1
    %s517 = scalar_lea.sflag [#allocation3], 1
    %518 = vsyncpa %s517, 1
    %519 = vsyncpa [#allocation6], 1
    %520 = vsyncpa [#allocation9], 1
    %521 = vsyncpa [#allocation4], 1
    %s522 = scalar_lea.sflag [#allocation4], 1
    %523 = vsyncpa %s522, 1

</llo_original>
